<compile_context>
chip_gen: v5e
topology: v5e:2x2
jax: 0.10.0
libtpu: 0.0.40
codegen_flags: <defaults>
</compile_context>

<pallas_src>
import functools

import jax
import jax.numpy as jnp
import numpy as np
from jax.experimental import pallas as pl
from jax.experimental.pallas import tpu as pltpu

_LANE = 128
_EPI_CHUNK = 1024               # lanes per matmul/epilogue sub-block (bounds vreg use)
_TARGET_STEP_BYTES = 2 << 20    # ~2 MiB of tensor traffic per grid step
_VMEM_BUDGET = 36 << 20         # conservative: leaves headroom on v7x (64 MiB physical)


def _round_up(a, b):
    return ((a + b - 1) // b) * b


def _cdiv(a, b):
    return -(-a // b)


def _pick_nb(per_item_bytes, n):
    """Batch elements per grid step: hit the byte target, keep >=2 steps, divide N."""
    nb = int(max(1, min(n, _TARGET_STEP_BYTES // max(1, per_item_bytes))))
    if n >= 2:
        nb = min(nb, _cdiv(n, 2))       # >= 2 grid steps so both v7x TensorCores get work
    while n % nb:
        nb -= 1                         # exact batch blocks (no partial leading block)
    return nb


# ----------------------------------------------------------------------------
# Kernel body (shared by the fused stride-1 path and the im2col fallback):
#   acc = sum_t W[t] @ P[b, :, t*row_shift + q : ... + chunk] + bias
#   out = acc[:OCp] * sigmoid(acc[OCp:])           (lane-dense stores)
#   p_ref : (NB, Keff, SP_in)    w_ref : (T, 2*OCp, Keff)   b_ref : (2*OCp, 1) f32
#   o_ref : (NB, OCp, SP_out)    m_ref : optional (NB, OCp, SP_out)
# ----------------------------------------------------------------------------
def _gated_conv_body(p_ref, w_ref, b_ref, o_ref, m_ref, *, row_shift, chunk):
    nb, ocp, sp_out = o_ref.shape
    n_taps = w_ref.shape[0]
    bias = b_ref[...]                                     # (2*OCp, 1), f32
    for b in range(nb):                                   # static unroll over batch block
        for q0 in range(0, sp_out, chunk):                # static lane chunks
            qlen = min(chunk, sp_out - q0)
            acc = jnp.zeros((2 * ocp, qlen), jnp.float32)
            for t in range(n_taps):                       # KH taps (fused) or 1 (im2col)
                off = t * row_shift + q0
                acc = acc + jnp.dot(w_ref[t], p_ref[b, :, off:off + qlen],
                                    preferred_element_type=jnp.float32)
            acc = acc + bias
            mask = jax.nn.sigmoid(acc[ocp:])              # f32 epilogue (v5e-safe)
            o_ref[b, :, q0:q0 + qlen] = (acc[:ocp] * mask).astype(o_ref.dtype)
            if m_ref is not None:
                m_ref[b, :, q0:q0 + qlen] = mask.astype(m_ref.dtype)


def _make_kernel(row_shift, chunk, with_mask):
    if with_mask:
        def kernel(p_ref, w_ref, b_ref, o_ref, m_ref):
            _gated_conv_body(p_ref, w_ref, b_ref, o_ref, m_ref,
                             row_shift=row_shift, chunk=chunk)
    else:
        def kernel(p_ref, w_ref, b_ref, o_ref):
            _gated_conv_body(p_ref, w_ref, b_ref, o_ref, None,
                             row_shift=row_shift, chunk=chunk)
    return kernel


def _pad_rows(a, rows):
    if a.shape[0] == rows:
        return a
    pad = [(0, rows - a.shape[0])] + [(0, 0)] * (a.ndim - 1)
    return jnp.pad(a, pad)


# ----------------------------------------------------------------------------
# Operand builders (plain JAX glue)
# ----------------------------------------------------------------------------
def _fused_operands(x, w_img, b_img, w_gate, b_gate, ocp, kh, kw, padding, dilation,
                    cdtype):
    """stride==1 operands: width-only (KW) unfold whose frame width equals OW."""
    N, C, H, W = x.shape
    xp = jnp.pad(x.astype(cdtype),
                 ((0, 0), (0, 0), (padding, padding), (padding, padding)))
    Hp, Wp = H + 2 * padding, W + 2 * padding
    OH = Hp - dilation * (kh - 1)
    OW = Wp - dilation * (kw - 1)
    R = OH + dilation * (kh - 1)                      # rows touched (== Hp for stride 1)
    cols = jnp.stack([xp[:, :, :R, j * dilation:j * dilation + OW] for j in range(kw)],
                     axis=2)                          # (N, C, KW, R, OW)
    p = cols.reshape(N, C * kw, R * OW)               # k index = c*KW + j (lane-dense)

    def prep_w(w):                                    # (OC, C, KH, KW) -> (KH, OCp, C*KW)
        oc = w.shape[0]
        w = jnp.transpose(w, (2, 0, 1, 3)).reshape(kh, oc, C * kw)
        if oc != ocp:
            w = jnp.pad(w, ((0, 0), (0, ocp - oc), (0, 0)))
        return w

    w_cat = jnp.concatenate([prep_w(w_img), prep_w(w_gate)], axis=1).astype(cdtype)
    b_cat = jnp.concatenate([_pad_rows(b_img, ocp), _pad_rows(b_gate, ocp)]
                            ).astype(jnp.float32).reshape(2 * ocp, 1)
    return p, w_cat, b_cat, OH, OW


def _im2col_kmajor(x, kh, kw, stride, padding, dilation):
    """x: (N, C, H, W) -> (N, C*KH*KW, OH*OW), k = c*KH*KW + i*KW + j."""
    N, C, H, W = x.shape
    xp = jnp.pad(x, ((0, 0), (0, 0), (padding, padding), (padding, padding)))
    Hp, Wp = H + 2 * padding, W + 2 * padding
    OH = (Hp - dilation * (kh - 1) - 1) // stride + 1
    OW = (Wp - dilation * (kw - 1) - 1) // stride + 1
    cols = []
    for i in range(kh):
        for j in range(kw):
            r0, c0 = i * dilation, j * dilation
            cols.append(xp[:, :, r0:r0 + stride * (OH - 1) + 1:stride,
                              c0:c0 + stride * (OW - 1) + 1:stride])
    cols = jnp.stack(cols, axis=2)                    # (N, C, KH*KW, OH, OW)
    return cols.reshape(N, C * kh * kw, OH * OW), OH, OW


def _im2col_operands(x, w_img, b_img, w_gate, b_gate, ocp, kh, kw, stride, padding,
                     dilation, cdtype):
    patches, OH, OW = _im2col_kmajor(x.astype(cdtype), kh, kw, stride, padding, dilation)
    K = patches.shape[1]

    def prep_w(w):
        return _pad_rows(w.reshape(w.shape[0], -1), ocp)

    w_cat = jnp.concatenate([prep_w(w_img), prep_w(w_gate)], axis=0).astype(cdtype)[None]
    b_cat = jnp.concatenate([_pad_rows(b_img, ocp), _pad_rows(b_gate, ocp)]
                            ).astype(jnp.float32).reshape(2 * ocp, 1)
    return patches, w_cat, b_cat, OH, OW, K


# ----------------------------------------------------------------------------
# GatedConv2d forward (NCHW in / NCHW out, matching PyTorch semantics)
# ----------------------------------------------------------------------------
@functools.partial(jax.jit, static_argnames=("kernel_size", "stride", "padding",
                                             "dilation", "return_mask",
                                             "compute_dtype"))
def gated_conv2d(x, w_img, b_img, w_gate, b_gate, *, kernel_size, stride, padding,
                 dilation, return_mask=False, compute_dtype=jnp.bfloat16):
    """out = conv(x, w_img) * sigmoid(conv(x, w_gate)); optionally also the mask.

    compute_dtype=bfloat16 (default) halves the dominant operand HBM traffic;
    accumulation, bias and the sigmoid/multiply epilogue stay float32.  Pass
    compute_dtype=jnp.float32 for exact parity with the float32 PyTorch module.
    """
    N, C, H, W = x.shape
    OC = w_img.shape[0]
    KH = KW = kernel_size
    assert w_img.shape == (OC, C, KH, KW) and w_gate.shape == (OC, C, KH, KW)
    out_dtype = x.dtype
    cdtype = jnp.dtype(compute_dtype)
    cbytes = cdtype.itemsize
    obytes = jnp.dtype(out_dtype).itemsize
    ocp = _round_up(OC, 8)              # sublane-aligned img/gate channel split
    n_out = 2 if return_mask else 1

    use_fused = (stride == 1)
    if use_fused:
        p, w_cat, b_cat, OH, OW = _fused_operands(
            x, w_img, b_img, w_gate, b_gate, ocp, KH, KW, padding, dilation, cdtype)
        keff, sp_in = p.shape[1], p.shape[2]
        msp = OH * OW
        row_shift = dilation * OW
        w_bytes = w_cat.size * cbytes
        per_img = keff * sp_in * cbytes + n_out * ocp * msp * obytes
        nb = _pick_nb(per_img, N)
        while nb > 1 and 2 * nb * per_img + w_bytes > _VMEM_BUDGET:
            nb -= 1
            while N % nb:
                nb -= 1
        if 2 * per_img + w_bytes > _VMEM_BUDGET:
            # TODO(synk): very large per-image working sets want a manual-DMA row-slab
            # pipeline instead of falling back to the spatially tiled im2col path.
            use_fused = False

    if use_fused:
        grid = (_cdiv(N, nb),)
        in_specs = [
            pl.BlockSpec((nb, keff, sp_in), lambda i: (i, 0, 0)),      # unfolded input
            pl.BlockSpec(w_cat.shape, lambda i: (0, 0, 0)),            # resident weights
            pl.BlockSpec((2 * ocp, 1), lambda i: (0, 0)),              # resident bias
        ]
        out_block = pl.BlockSpec((nb, ocp, msp), lambda i: (i, 0, 0))
        dims = ("parallel",)
        operands = (p, w_cat, b_cat)
        vmem_need = 2 * nb * per_img + w_bytes
    else:
        patches, w_cat, b_cat, OH, OW, K = _im2col_operands(
            x, w_img, b_img, w_gate, b_gate, ocp, KH, KW, stride, padding, dilation,
            cdtype)
        msp = OH * OW
        row_shift = 0
        # Lane-dense spatial tile sized by bytes (~_TARGET_STEP_BYTES per step).
        tile_sp = max(_LANE, (_TARGET_STEP_BYTES // (K * cbytes)) // _LANE * _LANE)
        tile_sp = min(tile_sp, 8192)
        if tile_sp >= msp:
            tile_sp = msp               # single full-extent block: no pad, no partial tile
        w_bytes = w_cat.size * cbytes
        per_tile = (K * cbytes + n_out * ocp * obytes) * tile_sp
        nb = _pick_nb(per_tile, N)
        while 2 * nb * per_tile + w_bytes > _VMEM_BUDGET and (nb > 1 or tile_sp > _LANE):
            if nb > 1:
                nb -= 1
                while N % nb:
                    nb -= 1
            else:
                tile_sp = max(_LANE, (tile_sp // 2) // _LANE * _LANE)
            per_tile = (K * cbytes + n_out * ocp * obytes) * tile_sp
        grid = (_cdiv(N, nb), _cdiv(msp, tile_sp))
        in_specs = [
            pl.BlockSpec((nb, K, tile_sp), lambda i, s: (i, 0, s)),
            pl.BlockSpec(w_cat.shape, lambda i, s: (0, 0, 0)),
            pl.BlockSpec((2 * ocp, 1), lambda i, s: (0, 0)),
        ]
        out_block = pl.BlockSpec((nb, ocp, tile_sp), lambda i, s: (i, 0, s))
        dims = ("parallel", "parallel")
        operands = (patches, w_cat, b_cat)
        vmem_need = 2 * nb * per_tile + w_bytes

    kernel = _make_kernel(row_shift, _EPI_CHUNK, return_mask)
    out_struct = jax.ShapeDtypeStruct((N, ocp, msp), out_dtype)
    out_shape = (out_struct, out_struct) if return_mask else out_struct
    out_specs = (out_block, out_block) if return_mask else out_block

    res = pl.pallas_call(
        kernel,
        out_shape=out_shape,
        grid_spec=pltpu.PrefetchScalarGridSpec(
            num_scalar_prefetch=0, grid=grid, in_specs=in_specs, out_specs=out_specs),
        compiler_params=pltpu.CompilerParams(
            dimension_semantics=dims,
            # Explicit VMEM budget: above v5e's 16 MiB scoped default, inside v7x's
            # 64 MiB physical VMEM.
            vmem_limit_bytes=int(min(max(2 * vmem_need + (2 << 20), 32 << 20), 48 << 20))),
    )(*operands)

    def _to_nchw(o):
        if ocp != OC:
            o = o[:, :OC]               # strip channel padding (only when OC % 8 != 0)
        return o.reshape(N, OC, OH, OW)

    if return_mask:
        return _to_nchw(res[0]), _to_nchw(res[1])
    return _to_nchw(res)


# ----------------------------------------------------------------------------
# Reference (pure JAX) for correctness checks
# ----------------------------------------------------------------------------
def _ref_gated_conv2d(x, w_img, b_img, w_gate, b_gate, *, stride, padding, dilation):
    dn = jax.lax.conv_dimension_numbers(x.shape, w_img.shape, ("NCHW", "OIHW", "NCHW"))
    conv = lambda w: jax.lax.conv_general_dilated(
        x, w, window_strides=(stride, stride),
        padding=[(padding, padding), (padding, padding)],
        rhs_dilation=(dilation, dilation), dimension_numbers=dn,
        precision=jax.lax.Precision.HIGHEST)
    xi = conv(w_img) + b_img[None, :, None, None]
    xg = conv(w_gate) + b_gate[None, :, None, None]
    mask = jax.nn.sigmoid(xg)
    return xi * mask, mask


def _make_params(key, c_in, c_out, k):
    kwi, kbi, kwg, kbg = jax.random.split(key, 4)
    fan_in = c_in * k * k
    bound = 1.0 / np.sqrt(fan_in)
    u = lambda kk, shape: jax.random.uniform(kk, shape, minval=-bound, maxval=bound,
                                             dtype=jnp.float32)
    return (u(kwi, (c_out, c_in, k, k)), u(kbi, (c_out,)),
            u(kwg, (c_out, c_in, k, k)), u(kbg, (c_out,)))


def _run_case(name, key, *, n, c_in, c_out, hw, ksize, stride, pad, dil, compute_dtype,
              atol, rtol, return_mask=True):
    kx, kp = jax.random.split(key)
    x = jax.random.normal(kx, (n, c_in, hw, hw), dtype=jnp.float32)
    w_img, b_img, w_gate, b_gate = _make_params(kp, c_in, c_out, ksize)
    got = gated_conv2d(x, w_img, b_img, w_gate, b_gate, kernel_size=ksize, stride=stride,
                       padding=pad, dilation=dil, return_mask=return_mask,
                       compute_dtype=compute_dtype)
    got = jax.block_until_ready(got)
    ref_out, ref_mask = _ref_gated_conv2d(x, w_img, b_img, w_gate, b_gate,
                                          stride=stride, padding=pad, dilation=dil)
    pairs = ([("out", got[0], ref_out), ("mask", got[1], ref_mask)] if return_mask
             else [("out", got, ref_out)])
    for tag, a, b in pairs:
        a, b = np.asarray(a), np.asarray(b)
        if a.shape != b.shape:
            raise AssertionError(f"{name}/{tag}: shape {a.shape} vs {b.shape}")
        if not np.allclose(a, b, atol=atol, rtol=rtol):
            raise AssertionError(
                f"{name}/{tag}: max abs err {np.max(np.abs(a - b)):.3e}")


if __name__ == "__main__":
    key = jax.random.PRNGKey(0)
    k0, k1, k2 = jax.random.split(key, 3)

    # 1) stride-1 fused path, exact f32 check, fused mask output.
    _run_case("fused_f32", k0, n=2, c_in=4, c_out=8, hw=16, ksize=3, stride=1, pad=1,
              dil=1, compute_dtype=jnp.float32, atol=1e-4, rtol=1e-4)

    # 2) same shapes with the default bfloat16 compute dtype (DMA halved; f32
    #    accumulation + epilogue), loose tolerance.
    _run_case("fused_bf16", k0, n=2, c_in=4, c_out=8, hw=16, ksize=3, stride=1, pad=1,
              dil=1, compute_dtype=jnp.bfloat16, atol=5e-2, rtol=5e-2, return_mask=False)

    # 3) dilation=2, OC=6 (channel padding to 8), OH*OW=1600 (chunked epilogue).
    _run_case("fused_dilated", k1, n=1, c_in=3, c_out=6, hw=40, ksize=3, stride=1, pad=2,
              dil=2, compute_dtype=jnp.float32, atol=1e-4, rtol=1e-4)

    # 4) stride=2 -> spatially tiled im2col fallback path, odd spatial extent.
    _run_case("strided_fallback", k2, n=2, c_in=4, c_out=8, hw=17, ksize=3, stride=2,
              pad=1, dil=1, compute_dtype=jnp.float32, atol=1e-4, rtol=1e-4)

    print("KERNEL_OK")
</pallas_src>

<mosaic_0001>
module attributes {stable_mosaic.version = 11 : i64} {
  func.func @kernel(%arg0: i32, %arg1: memref<1x12x288xf32, #tpu.memory_space<vmem>>, %arg2: memref<3x16x12xf32, #tpu.memory_space<vmem>>, %arg3: memref<16x1xf32, #tpu.memory_space<vmem>>, %arg4: memref<1x8x256xf32, #tpu.memory_space<vmem>>, %arg5: memref<1x8x256xf32, #tpu.memory_space<vmem>>) attributes {dimension_semantics = [#tpu.dimension_semantics<parallel>], iteration_bounds = array<i64: 2>, scalar_prefetch = 0 : i64, scratch_operands = 0 : i64, tpu.core_type = #tpu.core_type<tc>, window_params = [{transform_indices = @transform_0, window_bounds = array<i64: 1, 12, 288>}, {pipeline_mode = #tpu.pipeline_mode<synchronous>, transform_indices = @transform_1, window_bounds = array<i64: 3, 16, 12>}, {pipeline_mode = #tpu.pipeline_mode<synchronous>, transform_indices = @transform_2, window_bounds = array<i64: 16, 1>}, {transform_indices = @transform_3, window_bounds = array<i64: 1, 8, 256>}, {transform_indices = @transform_4, window_bounds = array<i64: 1, 8, 256>}]} {
    %c0 = arith.constant 0 : index
    %c0_0 = arith.constant 0 : index
    %0 = vector.load %arg3[%c0, %c0_0] : memref<16x1xf32, #tpu.memory_space<vmem>>, vector<16x1xf32>
    %cst = arith.constant 0.000000e+00 : f32
    %1 = vector.broadcast %cst : f32 to vector<16x256xf32>
    %c0_1 = arith.constant 0 : index
    %c0_2 = arith.constant 0 : index
    %c0_3 = arith.constant 0 : index
    %2 = vector.load %arg2[%c0_1, %c0_2, %c0_3] : memref<3x16x12xf32, #tpu.memory_space<vmem>>, vector<1x16x12xf32>
    %3 = vector.shape_cast %2 : vector<1x16x12xf32> to vector<16x12xf32>
    %c0_4 = arith.constant 0 : index
    %c0_5 = arith.constant 0 : index
    %c0_6 = arith.constant 0 : index
    %4 = vector.load %arg1[%c0_4, %c0_5, %c0_6] : memref<1x12x288xf32, #tpu.memory_space<vmem>>, vector<1x12x256xf32>
    %5 = vector.shape_cast %4 : vector<1x12x256xf32> to vector<12x256xf32>
    %cst_7 = arith.constant dense<0.000000e+00> : vector<16x256xf32>
    %6 = tpu.matmul %3, %5, %cst_7 {dimension_numbers = #tpu.dot_dimension_numbers<[1], [0], [0], [1], [0, 0, 1, 1], [], []>} : vector<16x12xf32>, vector<12x256xf32>, vector<16x256xf32> -> vector<16x256xf32>
    %7 = arith.addf %1, %6 : vector<16x256xf32>
    %c1 = arith.constant 1 : index
    %c0_8 = arith.constant 0 : index
    %c0_9 = arith.constant 0 : index
    %8 = vector.load %arg2[%c1, %c0_8, %c0_9] : memref<3x16x12xf32, #tpu.memory_space<vmem>>, vector<1x16x12xf32>
    %9 = vector.shape_cast %8 : vector<1x16x12xf32> to vector<16x12xf32>
    %c0_10 = arith.constant 0 : index
    %c0_11 = arith.constant 0 : index
    %c16 = arith.constant 16 : index
    %10 = vector.load %arg1[%c0_10, %c0_11, %c16] : memref<1x12x288xf32, #tpu.memory_space<vmem>>, vector<1x12x256xf32>
    %11 = vector.shape_cast %10 : vector<1x12x256xf32> to vector<12x256xf32>
    %cst_12 = arith.constant dense<0.000000e+00> : vector<16x256xf32>
    %12 = tpu.matmul %9, %11, %cst_12 {dimension_numbers = #tpu.dot_dimension_numbers<[1], [0], [0], [1], [0, 0, 1, 1], [], []>} : vector<16x12xf32>, vector<12x256xf32>, vector<16x256xf32> -> vector<16x256xf32>
    %13 = arith.addf %7, %12 : vector<16x256xf32>
    %c2 = arith.constant 2 : index
    %c0_13 = arith.constant 0 : index
    %c0_14 = arith.constant 0 : index
    %14 = vector.load %arg2[%c2, %c0_13, %c0_14] : memref<3x16x12xf32, #tpu.memory_space<vmem>>, vector<1x16x12xf32>
    %15 = vector.shape_cast %14 : vector<1x16x12xf32> to vector<16x12xf32>
    %c0_15 = arith.constant 0 : index
    %c0_16 = arith.constant 0 : index
    %c32 = arith.constant 32 : index
    %16 = vector.load %arg1[%c0_15, %c0_16, %c32] : memref<1x12x288xf32, #tpu.memory_space<vmem>>, vector<1x12x256xf32>
    %17 = vector.shape_cast %16 : vector<1x12x256xf32> to vector<12x256xf32>
    %cst_17 = arith.constant dense<0.000000e+00> : vector<16x256xf32>
    %18 = tpu.matmul %15, %17, %cst_17 {dimension_numbers = #tpu.dot_dimension_numbers<[1], [0], [0], [1], [0, 0, 1, 1], [], []>} : vector<16x12xf32>, vector<12x256xf32>, vector<16x256xf32> -> vector<16x256xf32>
    %19 = arith.addf %13, %18 : vector<16x256xf32>
    %20 = vector.broadcast %0 : vector<16x1xf32> to vector<16x256xf32>
    %21 = arith.addf %19, %20 : vector<16x256xf32>
    %22 = vector.extract_strided_slice %21 {offsets = [8, 0], sizes = [8, 256], strides = [1, 1]} : vector<16x256xf32> to vector<8x256xf32>
    %23 = arith.negf %22 : vector<8x256xf32>
    %24 = math.exp %23 : vector<8x256xf32>
    %cst_18 = arith.constant 1.000000e+00 : f32
    %25 = vector.broadcast %cst_18 : f32 to vector<8x256xf32>
    %26 = arith.addf %25, %24 : vector<8x256xf32>
    %27 = arith.divf %25, %26 : vector<8x256xf32>
    %28 = vector.extract_strided_slice %21 {offsets = [0, 0], sizes = [8, 256], strides = [1, 1]} : vector<16x256xf32> to vector<8x256xf32>
    %29 = arith.mulf %28, %27 : vector<8x256xf32>
    %c0_19 = arith.constant 0 : index
    %c0_20 = arith.constant 0 : index
    %c0_21 = arith.constant 0 : index
    %30 = vector.load %arg4[%c0_19, %c0_20, %c0_21] : memref<1x8x256xf32, #tpu.memory_space<vmem>>, vector<1x8x256xf32>
    %31 = vector.shape_cast %30 : vector<1x8x256xf32> to vector<8x256xf32>
    %32 = vector.shape_cast %29 : vector<8x256xf32> to vector<1x8x256xf32>
    tpu.vector_store %arg4[%c0_19, %c0_20, %c0_21], %32 {strides = array<i32>} : memref<1x8x256xf32, #tpu.memory_space<vmem>>, vector<1x8x256xf32>,
    %c0_22 = arith.constant 0 : index
    %c0_23 = arith.constant 0 : index
    %c0_24 = arith.constant 0 : index
    %33 = vector.load %arg5[%c0_22, %c0_23, %c0_24] : memref<1x8x256xf32, #tpu.memory_space<vmem>>, vector<1x8x256xf32>
    %34 = vector.shape_cast %33 : vector<1x8x256xf32> to vector<8x256xf32>
    %35 = vector.shape_cast %27 : vector<8x256xf32> to vector<1x8x256xf32>
    tpu.vector_store %arg5[%c0_22, %c0_23, %c0_24], %35 {strides = array<i32>} : memref<1x8x256xf32, #tpu.memory_space<vmem>>, vector<1x8x256xf32>,
    return
  }
  func.func @transform_0(%arg0: i32) -> (i32, i32, i32) {
    %c0_i32 = arith.constant 0 : i32
    %c0_i32_0 = arith.constant 0 : i32
    %c0_i32_1 = arith.constant 0 : i32
    return %arg0, %c0_i32, %c0_i32_0 : i32, i32, i32
  }
  func.func @transform_1(%arg0: i32) -> (i32, i32, i32) {
    %c0_i32 = arith.constant 0 : i32
    %c0_i32_0 = arith.constant 0 : i32
    %c0_i32_1 = arith.constant 0 : i32
    %c0_i32_2 = arith.constant 0 : i32
    return %c0_i32, %c0_i32_0, %c0_i32_1 : i32, i32, i32
  }
  func.func @transform_2(%arg0: i32) -> (i32, i32) {
    %c0_i32 = arith.constant 0 : i32
    %c0_i32_0 = arith.constant 0 : i32
    %c0_i32_1 = arith.constant 0 : i32
    return %c0_i32, %c0_i32_0 : i32, i32
  }
  func.func @transform_3(%arg0: i32) -> (i32, i32, i32) {
    %c0_i32 = arith.constant 0 : i32
    %c0_i32_0 = arith.constant 0 : i32
    %c0_i32_1 = arith.constant 0 : i32
    return %arg0, %c0_i32, %c0_i32_0 : i32, i32, i32
  }
  func.func @transform_4(%arg0: i32) -> (i32, i32, i32) {
    %c0_i32 = arith.constant 0 : i32
    %c0_i32_0 = arith.constant 0 : i32
    %c0_i32_1 = arith.constant 0 : i32
    return %arg0, %c0_i32, %c0_i32_0 : i32, i32, i32
  }
}

</mosaic_0001>

<llo_original>
// kernel: gated_conv2d.1
$region0: #{gated_conv2d.1}
  #allocation0 [shape = 'u32[]', space=smem, size = 0x4, offset = 0x4, fixed_abs, tag = 'smem constant byte address 0x4 - core index']
  #allocation1 [shape = 'u32[72,128]{1,0:T(1,128)}', space=vmem, size = 0x9000, scoped, tag = 'internal scratch']
  %s0 = inlined_call_operand.vmem [shape: f32[2,12,288], index: 0, kind: input, shape index: {}]
  %s1 = inlined_call_operand.vmem [shape: f32[3,16,12], index: 1, kind: input, shape index: {}]
  %s2 = inlined_call_operand.vmem [shape: f32[16,1], index: 2, kind: input, shape index: {}]
  %s3 = inlined_call_operand.vmem [shape: f32[2,8,256], index: 3, kind: output, shape index: {0}]
  %s4 = inlined_call_operand.vmem [shape: f32[2,8,256], index: 4, kind: output, shape index: {1}]
  %5 = xla_tuple %s3, %s4
  %s6 = sld [smem:[#allocation0]]
  $region53: #{gated_conv2d.1} parent=0
    _
  %s8 = ssub.s32 1, %s6
  %s9 = scalar_select 0, %s8, %s6
  loop: start=0, step=1, limit=4
  $region2: #{gated_conv2d.1} parent=0 // loop_pre_header
    _
  $region3: #{gated_conv2d.1} parent=0 // loop_header
    %s11 = sphi 0, %s15
    %p12 = scmp.ge.s32.totalorder %s11, 4
    %s21 = sphi 0, %s23
    %s24 = sphi 0, %s21
    %s25 = sphi 0, %s24
    %s41 = sphi 0, %s25
    %s45 = sphi 0, %s45
    %s47 = sphi 0, %s45
    %s48 = sphi 0, %s47
    %s62 = sphi 0, %s48
    %s66 = sphi 0, %s66
    %s68 = sphi 0, %s66
    %s69 = sphi 0, %s68
    %s83 = sphi 0, %s69
    %s89 = sphi 0, %s91
    %s92 = sphi 0, %s89
    %s93 = sphi 0, %s92
    %s109 = sphi 0, %s93
    %s115 = sphi 0, %s117
    %s118 = sphi 0, %s115
    %s119 = sphi 0, %s118
    %s135 = sphi 0, %s119
  $region4: #{gated_conv2d.1} parent=0 // loop_header_branch
    %14 = sbr.rel (%p12) target = $region8
  $region5: #{gated_conv2d.1} parent=0 // loop_body
    %s16 = ssub.s32 %s11, 1
    %s17 = ssub.s32 %s11, 2
    %s18 = sadd.s32 %s11, 1
    %s19 = ssub.s32 %s11, %s18
    %p20 = scmp.eq.s32.totalorder %s19, 0
    %s22 = sadd.s32 %s21, 1
    %s23 = scalar_select %p20, %s21, %s22
    %p26 = pneg %p20
    %p27 = scmp.eq.s32.totalorder %s11, 1
    %p28 = por %p26, %p27
    %p29 = scmp.ne.s32.totalorder %s21, %s24
    %p30 = scmp.eq.s32.totalorder %s11, 0
    %p31 = por %p29, %p30
    %p32 = scmp.ne.s32.totalorder %s21, %s24
    %p33 = scmp.eq.s32.totalorder %s16, 1
    %p34 = por %p32, %p33
    %p35 = scmp.ne.s32.totalorder %s24, %s25
    %p36 = scmp.eq.s32.totalorder %s16, 0
    %p37 = por %p35, %p36
    %p38 = scmp.ne.s32.totalorder %s24, %s25
    %p39 = scmp.eq.s32.totalorder %s17, 1
    %p40 = por %p38, %p39
    %p42 = scmp.ne.s32.totalorder %s25, %s41
    %p43 = scmp.eq.s32.totalorder %s17, 0
    %p44 = por %p42, %p43
    %s46 = sadd.s32 %s45, 1
    %p49 = scmp.eq.s32.totalorder %s11, 1
    %p50 = scmp.ne.s32.totalorder %s45, %s47
    %p51 = scmp.eq.s32.totalorder %s11, 0
    %p52 = por %p50, %p51
    %p53 = scmp.ne.s32.totalorder %s45, %s47
    %p54 = scmp.eq.s32.totalorder %s16, 1
    %p55 = por %p53, %p54
    %p56 = scmp.ne.s32.totalorder %s47, %s48
    %p57 = scmp.eq.s32.totalorder %s16, 0
    %p58 = por %p56, %p57
    %p59 = scmp.ne.s32.totalorder %s47, %s48
    %p60 = scmp.eq.s32.totalorder %s17, 1
    %p61 = por %p59, %p60
    %p63 = scmp.ne.s32.totalorder %s48, %s62
    %p64 = scmp.eq.s32.totalorder %s17, 0
    %p65 = por %p63, %p64
    %s67 = sadd.s32 %s66, 1
    %p70 = scmp.eq.s32.totalorder %s11, 1
    %p71 = scmp.ne.s32.totalorder %s66, %s68
    %p72 = scmp.eq.s32.totalorder %s11, 0
    %p73 = por %p71, %p72
    %p74 = scmp.ne.s32.totalorder %s66, %s68
    %p75 = scmp.eq.s32.totalorder %s16, 1
    %p76 = por %p74, %p75
    %p77 = scmp.ne.s32.totalorder %s68, %s69
    %p78 = scmp.eq.s32.totalorder %s16, 0
    %p79 = por %p77, %p78
    %p80 = scmp.ne.s32.totalorder %s68, %s69
    %p81 = scmp.eq.s32.totalorder %s17, 1
    %p82 = por %p80, %p81
    %p84 = scmp.ne.s32.totalorder %s69, %s83
    %p85 = scmp.eq.s32.totalorder %s17, 0
    %p86 = por %p84, %p85
    %s87 = ssub.s32 %s11, %s18
    %p88 = scmp.eq.s32.totalorder %s87, 0
    %s90 = sadd.s32 %s89, 1
    %s91 = scalar_select %p88, %s89, %s90
    %p94 = pneg %p88
    %p95 = scmp.eq.s32.totalorder %s11, 1
    %p96 = por %p94, %p95
    %p97 = scmp.ne.s32.totalorder %s89, %s92
    %p98 = scmp.eq.s32.totalorder %s11, 0
    %p99 = por %p97, %p98
    %p100 = scmp.ne.s32.totalorder %s89, %s92
    %p101 = scmp.eq.s32.totalorder %s16, 1
    %p102 = por %p100, %p101
    %p103 = scmp.ne.s32.totalorder %s92, %s93
    %p104 = scmp.eq.s32.totalorder %s16, 0
    %p105 = por %p103, %p104
    %p106 = scmp.ne.s32.totalorder %s92, %s93
    %p107 = scmp.eq.s32.totalorder %s17, 1
    %p108 = por %p106, %p107
    %p110 = scmp.ne.s32.totalorder %s93, %s109
    %p111 = scmp.eq.s32.totalorder %s17, 0
    %p112 = por %p110, %p111
    %s113 = ssub.s32 %s11, %s18
    %p114 = scmp.eq.s32.totalorder %s113, 0
    %s116 = sadd.s32 %s115, 1
    %s117 = scalar_select %p114, %s115, %s116
    %p120 = pneg %p114
    %p121 = scmp.eq.s32.totalorder %s11, 1
    %p122 = por %p120, %p121
    %p123 = scmp.ne.s32.totalorder %s115, %s118
    %p124 = scmp.eq.s32.totalorder %s11, 0
    %p125 = por %p123, %p124
    %p126 = scmp.ne.s32.totalorder %s115, %s118
    %p127 = scmp.eq.s32.totalorder %s16, 1
    %p128 = por %p126, %p127
    %p129 = scmp.ne.s32.totalorder %s118, %s119
    %p130 = scmp.eq.s32.totalorder %s16, 0
    %p131 = por %p129, %p130
    %p132 = scmp.ne.s32.totalorder %s118, %s119
    %p133 = scmp.eq.s32.totalorder %s17, 1
    %p134 = por %p132, %p133
    %p136 = scmp.ne.s32.totalorder %s119, %s135
    %p137 = scmp.eq.s32.totalorder %s17, 0
    %p138 = por %p136, %p137
    %p139 = scmp.le.s32.totalorder 1, %s11
    %p140 = scmp.lt.s32.totalorder %s11, 3
    %p141 = pnand %p139, %p140
    %p142 = pneg %p141
    // Predicated region
    $region9: #{gated_conv2d.1} parent=5 // pred_check
      _
    $region10: #{gated_conv2d.1} parent=5 // pred_check_branch
      %144 = sbr.rel (%p141) target = $region12
    $region11: #{gated_conv2d.1} parent=5 // pred_region
      %s145 = ssub.s32 %s11, 1
      // Predicated region
      $region13: #{gated_conv2d.1} parent=11 // pred_check
        %p146 = pneg %p58
      $region14: #{gated_conv2d.1} parent=11 // pred_check_branch
        %148 = sbr.rel (%p146) target = $region16
      $region15: #{gated_conv2d.1} parent=11 // pred_region
        _
      $region16: #{gated_conv2d.1} parent=11 // pred_fallthru
        _
      // Predicated region
      $region17: #{gated_conv2d.1} parent=11 // pred_check
        %p149 = pneg %p79
      $region18: #{gated_conv2d.1} parent=11 // pred_check_branch
        %151 = sbr.rel (%p149) target = $region20
      $region19: #{gated_conv2d.1} parent=11 // pred_region
        _
      $region20: #{gated_conv2d.1} parent=11 // pred_fallthru
        _
    $region12: #{gated_conv2d.1} parent=5 // pred_fallthru
      _
    %p152 = scmp.lt.s32.totalorder %s11, 2
    // Predicated region
    $region21: #{gated_conv2d.1} parent=5 // pred_check
      %p153 = pneg %p152
    $region22: #{gated_conv2d.1} parent=5 // pred_check_branch
      %155 = sbr.rel (%p153) target = $region24
    $region23: #{gated_conv2d.1} parent=5 // pred_region
      // Predicated region
      $region25: #{gated_conv2d.1} parent=23 // pred_check
        %p156 = pneg %p31
      $region26: #{gated_conv2d.1} parent=23 // pred_check_branch
        %158 = sbr.rel (%p156) target = $region28
      $region27: #{gated_conv2d.1} parent=23 // pred_region
        %p159 = scmp.lt.s32.totalorder %s11, 1
        %s160 = scalar_select %p159, %s11, 1
        %s161 = smul.addr %s160, 6
        %s162 = smul.addr %s161, 8
        %s163 = scalar_lea.vmem %s0, %s162
      $region28: #{gated_conv2d.1} parent=23 // pred_fallthru
        _
    $region24: #{gated_conv2d.1} parent=5 // pred_fallthru
      _
    %p164 = scmp.le.s32.totalorder 1, %s11
    %p165 = scmp.lt.s32.totalorder %s11, 3
    %p166 = pnand %p164, %p165
    %p167 = pneg %p166
    // Predicated region
    $region29: #{gated_conv2d.1} parent=5 // pred_check
      _
    $region30: #{gated_conv2d.1} parent=5 // pred_check_branch
      %169 = sbr.rel (%p166) target = $region32
    $region31: #{gated_conv2d.1} parent=5 // pred_region
      %s170 = ssub.s32 %s11, 1
      %p171 = scmp.lt.s32.totalorder %s16, 1
      %s172 = scalar_select %p171, %s16, 1
      %s173 = smul.addr %s172, 6
      %s174 = smul.addr %s173, 8
      %s175 = scalar_lea.vmem %s0, %s174
      %p176 = pneg %p37
      %p177 = pneg %p34
      %p178 = pneg %p58
      %p179 = pneg %p55
      %p180 = pneg %p79
      %p181 = pneg %p76
      %p182 = pneg %p105
      %p183 = pneg %p102
      %p184 = scmp.lt.s32.totalorder %s16, 1
      %s185 = scalar_select %p184, %s16, 1
      %s186 = smul.addr %s185, 2
      %s187 = smul.addr %s186, 8
      %s188 = scalar_lea.vmem %s3, %s187
      %p189 = pneg %p131
      %p190 = pneg %p128
      %p191 = scmp.lt.s32.totalorder %s16, 1
      %s192 = scalar_select %p191, %s16, 1
      %s193 = smul.addr %s192, 2
      %s194 = smul.addr %s193, 8
      %s195 = scalar_lea.vmem %s4, %s194
      %p196 = scmp.lt.s32.totalorder %s16, 1
      %s197 = scalar_select %p196, %s16, 1
      %s198 = smul.addr %s197, 6
      %s199 = smul.addr %s198, 8
      %s200 = scalar_lea.vmem %s0, %s199
      %p201 = scmp.lt.s32.totalorder %s16, 1
      %s202 = scalar_select %p201, %s16, 1
      %s203 = smul.addr %s202, 2
      %s204 = smul.addr %s203, 8
      %s205 = scalar_lea.vmem %s3, %s204
      %p206 = scmp.lt.s32.totalorder %s16, 1
      %s207 = scalar_select %p206, %s16, 1
      %s208 = smul.addr %s207, 2
      %s209 = smul.addr %s208, 8
      %s210 = scalar_lea.vmem %s4, %s209
      %v211 = vld [vmem:[%s2] sm:$0xff]
      %v212 = vld [vmem:[%s2 + $0x8] sm:$0xff]
      %v213 = vld [vmem:[%s1] sm:$0xff]
      %v214 = vld [vmem:[%s1 + $0x8] sm:$0xff]
      %v215 = vld [vmem:[%s200] sm:$0xff]
      %v216 = vld [vmem:[%s200 + $0x8] sm:$0xff]
      %v217 = vld [vmem:[%s200 + $0x18] sm:$0xf]
      %v218 = vld [vmem:[%s200 + $0x20] sm:$0xf]
      %s219 = scalar_lea.vmem %s1, 16
      %v220 = vld [vmem:[%s219] sm:$0xff]
      %v221 = vld [vmem:[%s219 + $0x8] sm:$0xff]
      %v222 = vld [vmem:[%s200 + $0x10] sm:$0xff]
      %v223 = vld [vmem:[%s200 + $0x28] sm:$0xf]
      %230 = vrot.lane.b32.xlu0 %v215, 112
      %v231 = vpop.permute.xlu0 %230
      %232 = vrot.lane.b32.xlu0 %v216, 112
      %v233 = vpop.permute.xlu0 %232
      %234 = vrot.lane.b32.xlu0 %v222, 112
      %v235 = vpop.permute.xlu0 %234
      %236 = vrot.lane.b32.xlu0 %v217, 112
      %v237 = vpop.permute.xlu0 %236
      %238 = vrot.lane.b32.xlu0 %v218, 112
      %v239 = vpop.permute.xlu0 %238
      %240 = vrot.lane.b32.xlu0 %v223, 112
      %v241 = vpop.permute.xlu0 %240
      %vm242 = vcmask 916480
      %v243 = vsel %vm242, %v231, %v233
      %v244 = vsel %vm242, %v233, %v235
      %v245 = vsel %vm242, %v237, %v239
      %v246 = vsel %vm242, %v239, %v241
      %vm249 = vcmask 97280
      %v251 = vsel %vm249, %v220, 0
      %v254 = vsel %vm249, %v221, 0
      %vm256 = vcmask 1043456
      %v257 = vsel %vm256, %v245, 0
      %v259 = vsel %vm256, %v246, 0
      %261 = vmatpush.msra.mxu0 0.0
      %262 = vmatpush.msra.mxu0 0.0
      %263 = vmatpush.msra.mxu0 0.0
      %264 = vmatpush.msra.mxu0 0.0
      %265 = vmatpush.msra.mxu0 0.0
      %266 = vmatpush.msra.mxu0 0.0
      %267 = vmatpush.msra.mxu0 0.0
      %268 = vmatpush.msra.mxu0 0.0
      %269 = vmatpush.msra.mxu0 0.0
      %270 = vmatpush.msra.mxu0 0.0
      %271 = vmatpush.msra.mxu0 0.0
      %272 = vmatpush.msra.mxu0 0.0
      %273 = vmatpush.msra.mxu0 0.0
      %274 = vmatpush.msra.mxu0 0.0
      %275 = vmatpush.msra.mxu0 %v257
      %276 = vmatpush.msra.mxu0 %v243
      %277 = vmatmul.f32.gmra.mxu0 %v251
      %v278 = vpop.f32.mrf.mxu0
      %v279 = vadd.f32 0.0, %v278
      %280 = vmatmul.f32.gmra.mxu0 %v254
      %v281 = vpop.f32.mrf.mxu0
      %v282 = vadd.f32 0.0, %v281
      %283 = vdwg.mxu0
      %284 = vmatpush.msra.mxu0 0.0
      %285 = vmatpush.msra.mxu0 0.0
      %286 = vmatpush.msra.mxu0 0.0
      %287 = vmatpush.msra.mxu0 0.0
      %288 = vmatpush.msra.mxu0 0.0
      %289 = vmatpush.msra.mxu0 0.0
      %290 = vmatpush.msra.mxu0 0.0
      %291 = vmatpush.msra.mxu0 0.0
      %292 = vmatpush.msra.mxu0 0.0
      %293 = vmatpush.msra.mxu0 0.0
      %294 = vmatpush.msra.mxu0 0.0
      %295 = vmatpush.msra.mxu0 0.0
      %296 = vmatpush.msra.mxu0 0.0
      %297 = vmatpush.msra.mxu0 0.0
      %298 = vmatpush.msra.mxu0 %v259
      %299 = vmatpush.msra.mxu0 %v244
      %300 = vmatmul.f32.gmra.mxu0 %v251
      %v301 = vpop.f32.mrf.mxu0
      %v302 = vadd.f32 0.0, %v301
      %303 = vmatmul.f32.gmra.mxu0 %v254
      %v304 = vpop.f32.mrf.mxu0
      %v305 = vadd.f32 0.0, %v304
      %306 = vdwg.mxu0
      %v308 = vsel %vm249, %v213, 0
      %v311 = vsel %vm249, %v214, 0
      %v313 = vsel %vm256, %v217, 0
      %v315 = vsel %vm256, %v218, 0
      %317 = vmatpush.msra.mxu0 0.0
      %318 = vmatpush.msra.mxu0 0.0
      %319 = vmatpush.msra.mxu0 0.0
      %320 = vmatpush.msra.mxu0 0.0
      %321 = vmatpush.msra.mxu0 0.0
      %322 = vmatpush.msra.mxu0 0.0
      %323 = vmatpush.msra.mxu0 0.0
      %324 = vmatpush.msra.mxu0 0.0
      %325 = vmatpush.msra.mxu0 0.0
      %326 = vmatpush.msra.mxu0 0.0
      %327 = vmatpush.msra.mxu0 0.0
      %328 = vmatpush.msra.mxu0 0.0
      %329 = vmatpush.msra.mxu0 0.0
      %330 = vmatpush.msra.mxu0 0.0
      %331 = vmatpush.msra.mxu0 %v313
      %332 = vmatpush.msra.mxu0 %v215
      %333 = vmatmul.f32.gmra.mxu0 %v308
      %v334 = vpop.f32.mrf.mxu0
      %v335 = vadd.f32 %v279, %v334
      %336 = vmatmul.f32.gmra.mxu0 %v311
      %v337 = vpop.f32.mrf.mxu0
      %v338 = vadd.f32 %v282, %v337
      %339 = vdwg.mxu0
      %340 = vmatpush.msra.mxu0 0.0
      %341 = vmatpush.msra.mxu0 0.0
      %342 = vmatpush.msra.mxu0 0.0
      %343 = vmatpush.msra.mxu0 0.0
      %344 = vmatpush.msra.mxu0 0.0
      %345 = vmatpush.msra.mxu0 0.0
      %346 = vmatpush.msra.mxu0 0.0
      %347 = vmatpush.msra.mxu0 0.0
      %348 = vmatpush.msra.mxu0 0.0
      %349 = vmatpush.msra.mxu0 0.0
      %350 = vmatpush.msra.mxu0 0.0
      %351 = vmatpush.msra.mxu0 0.0
      %352 = vmatpush.msra.mxu0 0.0
      %353 = vmatpush.msra.mxu0 0.0
      %354 = vmatpush.msra.mxu0 %v315
      %355 = vmatpush.msra.mxu0 %v216
      %356 = vmatmul.f32.gmra.mxu0 %v308
      %v357 = vpop.f32.mrf.mxu0
      %v358 = vadd.f32 %v302, %v357
      %359 = vmatmul.f32.gmra.mxu0 %v311
      %v360 = vpop.f32.mrf.mxu0
      %v361 = vadd.f32 %v305, %v360
      %362 = vdwg.mxu0
      %s363 = scalar_lea.vmem %s1, 32
      %v364 = vld [vmem:[%s363] sm:$0xff]
      %v365 = vld [vmem:[%s363 + $0x8] sm:$0xff]
      %366 = vrot.lane.b32.xlu0 %v215, 96
      %v367 = vpop.permute.xlu0 %366
      %368 = vrot.lane.b32.xlu0 %v216, 96
      %v369 = vpop.permute.xlu0 %368
      %370 = vrot.lane.b32.xlu0 %v222, 96
      %v371 = vpop.permute.xlu0 %370
      %372 = vrot.lane.b32.xlu0 %v217, 96
      %v373 = vpop.permute.xlu0 %372
      %374 = vrot.lane.b32.xlu0 %v218, 96
      %v375 = vpop.permute.xlu0 %374
      %376 = vrot.lane.b32.xlu0 %v223, 96
      %v377 = vpop.permute.xlu0 %376
      %vm378 = vcmask 785408
      %v379 = vsel %vm378, %v367, %v369
      %v380 = vsel %vm378, %v369, %v371
      %v381 = vsel %vm378, %v373, %v375
      %v382 = vsel %vm378, %v375, %v377
      %v386 = vsel %vm249, %v364, 0
      %v389 = vsel %vm249, %v365, 0
      %v391 = vsel %vm256, %v381, 0
      %v393 = vsel %vm256, %v382, 0
      %395 = vmatpush.msra.mxu0 0.0
      %396 = vmatpush.msra.mxu0 0.0
      %397 = vmatpush.msra.mxu0 0.0
      %398 = vmatpush.msra.mxu0 0.0
      %399 = vmatpush.msra.mxu0 0.0
      %400 = vmatpush.msra.mxu0 0.0
      %401 = vmatpush.msra.mxu0 0.0
      %402 = vmatpush.msra.mxu0 0.0
      %403 = vmatpush.msra.mxu0 0.0
      %404 = vmatpush.msra.mxu0 0.0
      %405 = vmatpush.msra.mxu0 0.0
      %406 = vmatpush.msra.mxu0 0.0
      %407 = vmatpush.msra.mxu0 0.0
      %408 = vmatpush.msra.mxu0 0.0
      %409 = vmatpush.msra.mxu0 %v391
      %410 = vmatpush.msra.mxu0 %v379
      %411 = vmatmul.f32.gmra.mxu0 %v386
      %v412 = vpop.f32.mrf.mxu0
      %v413 = vadd.f32 0.0, %v412
      %414 = vmatmul.f32.gmra.mxu0 %v389
      %v415 = vpop.f32.mrf.mxu0
      %v416 = vadd.f32 0.0, %v415
      %417 = vdwg.mxu0
      %418 = vmatpush.msra.mxu0 0.0
      %419 = vmatpush.msra.mxu0 0.0
      %420 = vmatpush.msra.mxu0 0.0
      %421 = vmatpush.msra.mxu0 0.0
      %422 = vmatpush.msra.mxu0 0.0
      %423 = vmatpush.msra.mxu0 0.0
      %424 = vmatpush.msra.mxu0 0.0
      %425 = vmatpush.msra.mxu0 0.0
      %426 = vmatpush.msra.mxu0 0.0
      %427 = vmatpush.msra.mxu0 0.0
      %428 = vmatpush.msra.mxu0 0.0
      %429 = vmatpush.msra.mxu0 0.0
      %430 = vmatpush.msra.mxu0 0.0
      %431 = vmatpush.msra.mxu0 0.0
      %432 = vmatpush.msra.mxu0 %v393
      %433 = vmatpush.msra.mxu0 %v380
      %434 = vmatmul.f32.gmra.mxu0 %v386
      %v435 = vpop.f32.mrf.mxu0
      %v436 = vadd.f32 0.0, %v435
      %437 = vmatmul.f32.gmra.mxu0 %v389
      %v438 = vpop.f32.mrf.mxu0
      %v439 = vadd.f32 0.0, %v438
      %440 = vdwg.mxu0
      %v441 = vadd.f32 %v335, %v413
      %v442 = vadd.f32 %v358, %v436
      %v443 = vadd.f32 %v338, %v416
      %v444 = vadd.f32 %v361, %v439
      %446 = vset.pattern.permute.xlu0 0
      %447 = vperm.xlu0 %446, %v211
      %v448 = vpop.permute.xlu0 %447
      %451 = vset.pattern.permute.xlu0 0
      %452 = vperm.xlu0 %451, %v212
      %v453 = vpop.permute.xlu0 %452
      %v455 = vadd.f32 %v441, %v448
      %v456 = vadd.f32 %v442, %v448
      %v457 = vadd.f32 %v443, %v453
      %v458 = vadd.f32 %v444, %v453
      %v459 = vxor.u32 %v457, 2147483648
      %v460 = vxor.u32 %v458, 2147483648
      %v461 = vmul.f32 %v459, 1.442695
      %v462 = vpow.pop %v461
      %v463 = vmul.f32 %v460, 1.442695
      %v464 = vpow.pop %v463
      %v465 = vadd.f32 %v462, 1.0
      %v466 = vadd.f32 %v464, 1.0
      %v467 = vrcp.pop %v465
      %v468 = vmul.f32 %v465, %v467
      %v469 = vsub.f32 1.0, %v468
      %v470 = vmul.f32 %v467, %v469
      %v471 = vadd.f32 %v467, %v470
      %vm472 = vweird.f32 %v465
      %vm473 = vweird.f32 %v467
      %vm474 = vmor %vm472, %vm473
      %v475 = vsel %vm474, %v467, %v471
      %v476 = vand.u32 2147483647, %v465
      %vm477 = vcmp.eq.f32.partialorder %v476, 8.507059e+37
      %v478 = vand.u32 %v465, 2147483648
      %v479 = vor.u32 1.1754944e-38, %v478
      %v480 = vsel %vm477, %v479, %v475
      %v481 = vmul.f32 1.0, %v480
      %v482 = vrcp.pop %v466
      %v483 = vmul.f32 %v466, %v482
      %v484 = vsub.f32 1.0, %v483
      %v485 = vmul.f32 %v482, %v484
      %v486 = vadd.f32 %v482, %v485
      %vm487 = vweird.f32 %v466
      %vm488 = vweird.f32 %v482
      %vm489 = vmor %vm487, %vm488
      %v490 = vsel %vm489, %v482, %v486
      %v491 = vand.u32 2147483647, %v466
      %vm492 = vcmp.eq.f32.partialorder %v491, 8.507059e+37
      %v493 = vand.u32 %v466, 2147483648
      %v494 = vor.u32 1.1754944e-38, %v493
      %v495 = vsel %vm492, %v494, %v490
      %v496 = vmul.f32 1.0, %v495
      %v497 = vmul.f32 %v455, %v481
      %v498 = vmul.f32 %v456, %v496
      %499 = vst [vmem:[%s205] sm:$0xff] %v497
      %500 = vst [vmem:[%s205 + $0x8] sm:$0xff] %v498
      %501 = vst [vmem:[%s210] sm:$0xff] %v481
      %502 = vst [vmem:[%s210 + $0x8] sm:$0xff] %v496
      %p503 = scmp.lt.s32.totalorder %s16, 1
      %s504 = scalar_select %p503, %s16, 1
      %s505 = smul.addr %s504, 2
      %s506 = smul.addr %s505, 8
      %s507 = scalar_lea.vmem %s3, %s506
      %p508 = scmp.lt.s32.totalorder %s16, 1
      %s509 = scalar_select %p508, %s16, 1
      %s510 = smul.addr %s509, 2
      %s511 = smul.addr %s510, 8
      %s512 = scalar_lea.vmem %s4, %s511
      // Predicated region
      $region33: #{gated_conv2d.1} parent=31 // pred_check
        %p513 = pneg %p102
      $region34: #{gated_conv2d.1} parent=31 // pred_check_branch
        %515 = sbr.rel (%p513) target = $region36
      $region35: #{gated_conv2d.1} parent=31 // pred_region
        _
      $region36: #{gated_conv2d.1} parent=31 // pred_fallthru
        _
      // Predicated region
      $region37: #{gated_conv2d.1} parent=31 // pred_check
        %p516 = pneg %p128
      $region38: #{gated_conv2d.1} parent=31 // pred_check_branch
        %518 = sbr.rel (%p516) target = $region40
      $region39: #{gated_conv2d.1} parent=31 // pred_region
        _
      $region40: #{gated_conv2d.1} parent=31 // pred_fallthru
        _
    $region32: #{gated_conv2d.1} parent=5 // pred_fallthru
      _
    %p519 = scmp.le.s32.totalorder 2, %s11
    // Predicated region
    $region41: #{gated_conv2d.1} parent=5 // pred_check
      %p520 = pneg %p519
    $region42: #{gated_conv2d.1} parent=5 // pred_check_branch
      %522 = sbr.rel (%p520) target = $region44
    $region43: #{gated_conv2d.1} parent=5 // pred_region
      %s523 = ssub.s32 %s11, 2
      // Predicated region
      $region45: #{gated_conv2d.1} parent=43 // pred_check
        %p524 = pneg %p108
      $region46: #{gated_conv2d.1} parent=43 // pred_check_branch
        %526 = sbr.rel (%p524) target = $region48
      $region47: #{gated_conv2d.1} parent=43 // pred_region
        %p527 = scmp.lt.s32.totalorder %s17, 1
        %s528 = scalar_select %p527, %s17, 1
        %s529 = smul.addr %s528, 2
        %s530 = smul.addr %s529, 8
        %s531 = scalar_lea.vmem %s3, %s530
      $region48: #{gated_conv2d.1} parent=43 // pred_fallthru
        _
      // Predicated region
      $region49: #{gated_conv2d.1} parent=43 // pred_check
        %p532 = pneg %p134
      $region50: #{gated_conv2d.1} parent=43 // pred_check_branch
        %534 = sbr.rel (%p532) target = $region52
      $region51: #{gated_conv2d.1} parent=43 // pred_region
        %p535 = scmp.lt.s32.totalorder %s17, 1
        %s536 = scalar_select %p535, %s17, 1
        %s537 = smul.addr %s536, 2
        %s538 = smul.addr %s537, 8
        %s539 = scalar_lea.vmem %s4, %s538
      $region52: #{gated_conv2d.1} parent=43 // pred_fallthru
        _
    $region44: #{gated_conv2d.1} parent=5 // pred_fallthru
      _
  $region6: #{gated_conv2d.1} parent=0 // loop_footer
    %s15 = sadd.s32 1, %s11
  $region7: #{gated_conv2d.1} parent=0 // loop_footer_branch
    %10 = sbr.rel target = $region3
  $region8: #{gated_conv2d.1} parent=0 // loop_exit
    _

</llo_original>
